<compile_context>
chip_gen: v6e
topology: v6e:2x2x1
jax: 0.10.0
libtpu: 0.0.40
codegen_flags: <defaults>
</compile_context>

<pallas_src>
import jax
import jax.numpy as jnp
from jax.experimental import pallas as pl
from jax.experimental.pallas import tpu as pltpu

LANE = 128  # hidden (32) and num_actions (<=128) are zero-padded to this width


def _round_up(x, m):
    return ((x + m - 1) // m) * m


def dqn_kernel(x_ref, w1_ref, w23_ref, b_ref, o_ref):
    # x_ref:   (TB, num_inputs)   f32    -- streamed over the batch grid
    # w1_ref:  (num_inputs, 128)  bf16   -- resident (constant index_map)
    # w23_ref: (2, 128, 128)      bf16   -- [w2_padded, w3_padded], resident
    # b_ref:   (3, 128)           f32    -- [b1, b2, b3] zero-padded, resident
    # o_ref:   (TB, 128)          f32    -- lane-dense padded output
    x = x_ref[...].astype(jnp.bfloat16)
    w1 = w1_ref[...]
    w2 = w23_ref[0]
    w3 = w23_ref[1]
    b = b_ref[...]
    b1 = b[0:1, :]
    b2 = b[1:2, :]
    b3 = b[2:3, :]

    h1 = jnp.dot(x, w1, preferred_element_type=jnp.float32) + b1
    h1 = jnp.maximum(h1, 0.0).astype(jnp.bfloat16)
    h2 = jnp.dot(h1, w2, preferred_element_type=jnp.float32) + b2
    h2 = jnp.maximum(h2, 0.0).astype(jnp.bfloat16)
    out = jnp.dot(h2, w3, preferred_element_type=jnp.float32) + b3
    o_ref[...] = out.astype(o_ref.dtype)


def _dqn_forward_impl(states, params):
    """states: [B, num_inputs] float32 -> [B, num_actions] float32."""
    w1, b1, w2, b2, w3, b3 = params
    B, num_inputs = states.shape
    hidden = w1.shape[1]
    num_actions = w3.shape[1]
    assert hidden <= LANE and num_actions <= LANE

    # --- pack weights/biases (zero-pad hidden & num_actions to 128 lanes) ---
    w1p = jnp.zeros((num_inputs, LANE), jnp.bfloat16)
    w1p = w1p.at[:, :hidden].set(w1.astype(jnp.bfloat16))
    w2p = jnp.zeros((LANE, LANE), jnp.bfloat16)
    w2p = w2p.at[:hidden, :hidden].set(w2.astype(jnp.bfloat16))
    w3p = jnp.zeros((LANE, LANE), jnp.bfloat16)
    w3p = w3p.at[:hidden, :num_actions].set(w3.astype(jnp.bfloat16))
    w23p = jnp.stack([w2p, w3p], axis=0)               # (2, 128, 128) bf16

    bp = jnp.zeros((3, LANE), jnp.float32)
    bp = bp.at[0, :hidden].set(b1.reshape(-1))
    bp = bp.at[1, :hidden].set(b2.reshape(-1))
    bp = bp.at[2, :num_actions].set(b3.reshape(-1))    # (3, 128) f32

    # --- batch tiling: TB=256 (MXU-row aligned) for big B, full batch else ---
    if B > 256:
        TB = 256
    else:
        TB = _round_up(B, 8)
    B_pad = _round_up(B, TB)
    x = states
    if B_pad != B:
        x = jnp.pad(x, ((0, B_pad - B), (0, 0)))
    grid = (B_pad // TB,)

    flops = 2 * B_pad * (num_inputs * LANE + LANE * LANE + LANE * LANE)
    bytes_accessed = (x.size * 4 + w1p.size * 2 + w23p.size * 2 + bp.size * 4
                      + B_pad * LANE * 4)

    out = pl.pallas_call(
        dqn_kernel,
        out_shape=jax.ShapeDtypeStruct((B_pad, LANE), jnp.float32),
        grid=grid,
        in_specs=[
            pl.BlockSpec((TB, num_inputs), lambda i: (i, 0)),       # states tile
            pl.BlockSpec((num_inputs, LANE), lambda i: (0, 0)),     # w1 (resident)
            pl.BlockSpec((2, LANE, LANE), lambda i: (0, 0, 0)),     # w2|w3 (resident)
            pl.BlockSpec((3, LANE), lambda i: (0, 0)),              # biases (resident)
        ],
        out_specs=pl.BlockSpec((TB, LANE), lambda i: (i, 0)),
        compiler_params=pltpu.CompilerParams(
            dimension_semantics=("parallel",)),
        cost_estimate=pl.CostEstimate(
            flops=flops, transcendentals=0, bytes_accessed=bytes_accessed),
    )(x, w1p, w23p, bp)

    return out[:B, :num_actions]


dqn_forward = jax.jit(_dqn_forward_impl)


def init_dqn_params(key, num_inputs, num_actions, hidden=32):
    """Deterministic init mimicking nn.Linear default (uniform +/- 1/sqrt(fan_in)).
    Weights stored as [in, out] (transpose of PyTorch's [out, in])."""
    def linear(k, fan_in, fan_out):
        kw, kb = jax.random.split(k)
        bound = 1.0 / jnp.sqrt(fan_in)
        w = jax.random.uniform(kw, (fan_in, fan_out), jnp.float32, -bound, bound)
        b = jax.random.uniform(kb, (1, fan_out), jnp.float32, -bound, bound)
        return w, b

    k1, k2, k3 = jax.random.split(key, 3)
    w1, b1 = linear(k1, num_inputs, hidden)
    w2, b2 = linear(k2, hidden, hidden)
    w3, b3 = linear(k3, hidden, num_actions)
    return (w1, b1, w2, b2, w3, b3)


def dqn_reference(states, params):
    w1, b1, w2, b2, w3, b3 = params
    h1 = jnp.maximum(states @ w1 + b1, 0.0)
    h2 = jnp.maximum(h1 @ w2 + b2, 0.0)
    return h2 @ w3 + b3


if __name__ == "__main__":
    num_inputs = 16
    num_actions = 4

    key = jax.random.PRNGKey(0)
    k_params, k_x1, k_x2, k_x3 = jax.random.split(key, 4)
    params = init_dqn_params(k_params, num_inputs, num_actions)

    # Small inference-style batch (single grid step).
    states_small = jax.random.normal(k_x1, (8, num_inputs), jnp.float32)
    out_small = jax.block_until_ready(dqn_forward(states_small, params))
    ref_small = dqn_reference(states_small, params)
    assert out_small.shape == (8, num_actions)
    assert jnp.allclose(out_small, ref_small, atol=5e-2, rtol=5e-2)

    # Non-multiple-of-8 batch exercising the sublane padding path (5 -> 8).
    states_odd = jax.random.normal(k_x3, (5, num_inputs), jnp.float32)
    out_odd = jax.block_until_ready(dqn_forward(states_odd, params))
    ref_odd = dqn_reference(states_odd, params)
    assert out_odd.shape == (5, num_actions)
    assert jnp.allclose(out_odd, ref_odd, atol=5e-2, rtol=5e-2)

    # Replay-style batch exercising the batch grid + padding (300 -> 2 tiles of 256).
    states_big = jax.random.normal(k_x2, (300, num_inputs), jnp.float32)
    out_big = jax.block_until_ready(dqn_forward(states_big, params))
    ref_big = dqn_reference(states_big, params)
    assert out_big.shape == (300, num_actions)
    assert jnp.allclose(out_big, ref_big, atol=5e-2, rtol=5e-2)

    print("KERNEL_OK")
</pallas_src>

<mosaic_0001>
module attributes {stable_mosaic.version = 11 : i64} {
  func.func @dqn_kernel(%arg0: i32, %arg1: memref<8x16xf32, #tpu.memory_space<vmem>>, %arg2: memref<16x128xbf16, #tpu.memory_space<vmem>>, %arg3: memref<2x128x128xbf16, #tpu.memory_space<vmem>>, %arg4: memref<3x128xf32, #tpu.memory_space<vmem>>, %arg5: memref<8x128xf32, #tpu.memory_space<vmem>>) attributes {dimension_semantics = [#tpu.dimension_semantics<parallel>], iteration_bounds = array<i64: 1>, scalar_prefetch = 0 : i64, scratch_operands = 0 : i64, tpu.core_type = #tpu.core_type<tc>, window_params = [{transform_indices = @transform_0, window_bounds = array<i64: 8, 16>}, {pipeline_mode = #tpu.pipeline_mode<synchronous>, transform_indices = @transform_1, window_bounds = array<i64: 16, 128>}, {pipeline_mode = #tpu.pipeline_mode<synchronous>, transform_indices = @transform_2, window_bounds = array<i64: 2, 128, 128>}, {pipeline_mode = #tpu.pipeline_mode<synchronous>, transform_indices = @transform_3, window_bounds = array<i64: 3, 128>}, {transform_indices = @transform_4, window_bounds = array<i64: 8, 128>}]} {
    %c0 = arith.constant 0 : index
    %c0_0 = arith.constant 0 : index
    %0 = vector.load %arg1[%c0, %c0_0] : memref<8x16xf32, #tpu.memory_space<vmem>>, vector<8x16xf32>
    %1 = arith.truncf %0 : vector<8x16xf32> to vector<8x16xbf16>
    %c0_1 = arith.constant 0 : index
    %c0_2 = arith.constant 0 : index
    %2 = vector.load %arg2[%c0_1, %c0_2] : memref<16x128xbf16, #tpu.memory_space<vmem>>, vector<16x128xbf16>
    %c0_3 = arith.constant 0 : index
    %c0_4 = arith.constant 0 : index
    %c0_5 = arith.constant 0 : index
    %3 = vector.load %arg3[%c0_3, %c0_4, %c0_5] : memref<2x128x128xbf16, #tpu.memory_space<vmem>>, vector<1x128x128xbf16>
    %4 = vector.shape_cast %3 : vector<1x128x128xbf16> to vector<128x128xbf16>
    %c1 = arith.constant 1 : index
    %c0_6 = arith.constant 0 : index
    %c0_7 = arith.constant 0 : index
    %5 = vector.load %arg3[%c1, %c0_6, %c0_7] : memref<2x128x128xbf16, #tpu.memory_space<vmem>>, vector<1x128x128xbf16>
    %6 = vector.shape_cast %5 : vector<1x128x128xbf16> to vector<128x128xbf16>
    %c0_8 = arith.constant 0 : index
    %c0_9 = arith.constant 0 : index
    %7 = vector.load %arg4[%c0_8, %c0_9] : memref<3x128xf32, #tpu.memory_space<vmem>>, vector<3x128xf32>
    %8 = vector.extract_strided_slice %7 {offsets = [0, 0], sizes = [1, 128], strides = [1, 1]} : vector<3x128xf32> to vector<1x128xf32>
    %9 = vector.extract_strided_slice %7 {offsets = [1, 0], sizes = [1, 128], strides = [1, 1]} : vector<3x128xf32> to vector<1x128xf32>
    %10 = vector.extract_strided_slice %7 {offsets = [2, 0], sizes = [1, 128], strides = [1, 1]} : vector<3x128xf32> to vector<1x128xf32>
    %cst = arith.constant dense<0.000000e+00> : vector<8x128xf32>
    %11 = tpu.matmul %1, %2, %cst {dimension_numbers = #tpu.dot_dimension_numbers<[1], [0], [0], [1], [0, 0, 1, 1], [], []>} : vector<8x16xbf16>, vector<16x128xbf16>, vector<8x128xf32> -> vector<8x128xf32>
    %12 = vector.broadcast %8 : vector<1x128xf32> to vector<8x128xf32>
    %13 = arith.addf %11, %12 : vector<8x128xf32>
    %cst_10 = arith.constant 0.000000e+00 : f32
    %14 = vector.broadcast %cst_10 : f32 to vector<8x128xf32>
    %15 = arith.maximumf %13, %14 : vector<8x128xf32>
    %16 = arith.truncf %15 : vector<8x128xf32> to vector<8x128xbf16>
    %cst_11 = arith.constant dense<0.000000e+00> : vector<8x128xf32>
    %17 = tpu.matmul %16, %4, %cst_11 {dimension_numbers = #tpu.dot_dimension_numbers<[1], [0], [0], [1], [0, 0, 1, 1], [], []>} : vector<8x128xbf16>, vector<128x128xbf16>, vector<8x128xf32> -> vector<8x128xf32>
    %18 = vector.broadcast %9 : vector<1x128xf32> to vector<8x128xf32>
    %19 = arith.addf %17, %18 : vector<8x128xf32>
    %cst_12 = arith.constant 0.000000e+00 : f32
    %20 = vector.broadcast %cst_12 : f32 to vector<8x128xf32>
    %21 = arith.maximumf %19, %20 : vector<8x128xf32>
    %22 = arith.truncf %21 : vector<8x128xf32> to vector<8x128xbf16>
    %cst_13 = arith.constant dense<0.000000e+00> : vector<8x128xf32>
    %23 = tpu.matmul %22, %6, %cst_13 {dimension_numbers = #tpu.dot_dimension_numbers<[1], [0], [0], [1], [0, 0, 1, 1], [], []>} : vector<8x128xbf16>, vector<128x128xbf16>, vector<8x128xf32> -> vector<8x128xf32>
    %24 = vector.broadcast %10 : vector<1x128xf32> to vector<8x128xf32>
    %25 = arith.addf %23, %24 : vector<8x128xf32>
    %c0_14 = arith.constant 0 : index
    %c0_15 = arith.constant 0 : index
    %26 = vector.load %arg5[%c0_14, %c0_15] : memref<8x128xf32, #tpu.memory_space<vmem>>, vector<8x128xf32>
    tpu.vector_store %arg5[%c0_14, %c0_15], %25 {strides = array<i32>} : memref<8x128xf32, #tpu.memory_space<vmem>>, vector<8x128xf32>,
    return
  }
  func.func @transform_0(%arg0: i32) -> (i32, i32) {
    %c0_i32 = arith.constant 0 : i32
    %c0_i32_0 = arith.constant 0 : i32
    return %arg0, %c0_i32 : i32, i32
  }
  func.func @transform_1(%arg0: i32) -> (i32, i32) {
    %c0_i32 = arith.constant 0 : i32
    %c0_i32_0 = arith.constant 0 : i32
    %c0_i32_1 = arith.constant 0 : i32
    return %c0_i32, %c0_i32_0 : i32, i32
  }
  func.func @transform_2(%arg0: i32) -> (i32, i32, i32) {
    %c0_i32 = arith.constant 0 : i32
    %c0_i32_0 = arith.constant 0 : i32
    %c0_i32_1 = arith.constant 0 : i32
    %c0_i32_2 = arith.constant 0 : i32
    return %c0_i32, %c0_i32_0, %c0_i32_1 : i32, i32, i32
  }
  func.func @transform_3(%arg0: i32) -> (i32, i32) {
    %c0_i32 = arith.constant 0 : i32
    %c0_i32_0 = arith.constant 0 : i32
    %c0_i32_1 = arith.constant 0 : i32
    return %c0_i32, %c0_i32_0 : i32, i32
  }
  func.func @transform_4(%arg0: i32) -> (i32, i32) {
    %c0_i32 = arith.constant 0 : i32
    %c0_i32_0 = arith.constant 0 : i32
    return %arg0, %c0_i32 : i32, i32
  }
}

</mosaic_0001>

<llo_original>
// kernel: _dqn_forward_impl.1
$region0: #{_dqn_forward_impl.1}
  #allocation0 [shape = 'u32[]', space=smem, size = 0x4, offset = 0x4, fixed_abs, tag = 'smem constant byte address 0x4 - core index']
  #allocation1 [shape = 'u32[144,128]{1,0:T(1,128)}', space=vmem, size = 0x12000, scoped, tag = 'internal scratch']
  %s0 = inlined_call_operand.vmem [shape: f32[8,16], index: 0, kind: input, shape index: {}]
  %s1 = inlined_call_operand.vmem [shape: bf16[16,128], index: 1, kind: input, shape index: {}]
  %s2 = inlined_call_operand.vmem [shape: bf16[2,128,128], index: 2, kind: input, shape index: {}]
  %s3 = inlined_call_operand.vmem [shape: f32[3,128], index: 3, kind: input, shape index: {}]
  %s4 = inlined_call_operand.vmem [shape: f32[8,128], index: 4, kind: output, shape index: {}]
  %s5 = sld [smem:[#allocation0]]
  $region26: #{_dqn_forward_impl.1} parent=0
    _
  %s7 = ssub.s32 1, %s5
  %s8 = scalar_select 0, %s7, %s5
  // Predicated region
  $region2: #{_dqn_forward_impl.1} parent=0 // pred_check
    _
  $region3: #{_dqn_forward_impl.1} parent=0 // pred_check_branch
    %10 = sbr.rel (0) target = $region5
  $region4: #{_dqn_forward_impl.1} parent=0 // pred_region
    _
  $region5: #{_dqn_forward_impl.1} parent=0 // pred_fallthru
    _
  // Predicated region
  $region6: #{_dqn_forward_impl.1} parent=0 // pred_check
    _
  $region7: #{_dqn_forward_impl.1} parent=0 // pred_check_branch
    %12 = sbr.rel (0) target = $region9
  $region8: #{_dqn_forward_impl.1} parent=0 // pred_region
    _
  $region9: #{_dqn_forward_impl.1} parent=0 // pred_fallthru
    _
  // Predicated region
  $region10: #{_dqn_forward_impl.1} parent=0 // pred_check
    _
  $region11: #{_dqn_forward_impl.1} parent=0 // pred_check_branch
    %14 = sbr.rel (0) target = $region13
  $region12: #{_dqn_forward_impl.1} parent=0 // pred_region
    _
  $region13: #{_dqn_forward_impl.1} parent=0 // pred_fallthru
    _
  // Predicated region
  $region14: #{_dqn_forward_impl.1} parent=0 // pred_check
    _
  $region15: #{_dqn_forward_impl.1} parent=0 // pred_check_branch
    %16 = sbr.rel (0) target = $region17
  $region16: #{_dqn_forward_impl.1} parent=0 // pred_region
    _
  $region17: #{_dqn_forward_impl.1} parent=0 // pred_fallthru
    _
  %v18 = vld [vmem:[%s0] sm:$0xff]
  %v19 = vpack.c.bf16 %v18, %v18
  %v20 = vld [vmem:[%s1] sm:$0xf]
  %v21 = vld [vmem:[%s1 + $0x4] sm:$0xf]
  %v22 = vld [vmem:[%s2] sm:$0xf]
  %v23 = vld [vmem:[%s2 + $0x4] sm:$0xf]
  %v24 = vld [vmem:[%s2 + $0x8] sm:$0xf]
  %v25 = vld [vmem:[%s2 + $0xc] sm:$0xf]
  %v26 = vld [vmem:[%s2 + $0x10] sm:$0xf]
  %v27 = vld [vmem:[%s2 + $0x14] sm:$0xf]
  %v28 = vld [vmem:[%s2 + $0x18] sm:$0xf]
  %v29 = vld [vmem:[%s2 + $0x1c] sm:$0xf]
  %v30 = vld [vmem:[%s2 + $0x20] sm:$0xf]
  %v31 = vld [vmem:[%s2 + $0x24] sm:$0xf]
  %v32 = vld [vmem:[%s2 + $0x28] sm:$0xf]
  %v33 = vld [vmem:[%s2 + $0x2c] sm:$0xf]
  %v34 = vld [vmem:[%s2 + $0x30] sm:$0xf]
  %v35 = vld [vmem:[%s2 + $0x34] sm:$0xf]
  %v36 = vld [vmem:[%s2 + $0x38] sm:$0xf]
  %v37 = vld [vmem:[%s2 + $0x3c] sm:$0xf]
  %s38 = scalar_lea.vmem %s2, 64
  %v39 = vld [vmem:[%s38] sm:$0xf]
  %v40 = vld [vmem:[%s38 + $0x4] sm:$0xf]
  %v41 = vld [vmem:[%s38 + $0x8] sm:$0xf]
  %v42 = vld [vmem:[%s38 + $0xc] sm:$0xf]
  %v43 = vld [vmem:[%s38 + $0x10] sm:$0xf]
  %v44 = vld [vmem:[%s38 + $0x14] sm:$0xf]
  %v45 = vld [vmem:[%s38 + $0x18] sm:$0xf]
  %v46 = vld [vmem:[%s38 + $0x1c] sm:$0xf]
  %v47 = vld [vmem:[%s38 + $0x20] sm:$0xf]
  %v48 = vld [vmem:[%s38 + $0x24] sm:$0xf]
  %v49 = vld [vmem:[%s38 + $0x28] sm:$0xf]
  %v50 = vld [vmem:[%s38 + $0x2c] sm:$0xf]
  %v51 = vld [vmem:[%s38 + $0x30] sm:$0xf]
  %v52 = vld [vmem:[%s38 + $0x34] sm:$0xf]
  %v53 = vld [vmem:[%s38 + $0x38] sm:$0xf]
  %v54 = vld [vmem:[%s38 + $0x3c] sm:$0xf]
  %v55 = vld [vmem:[%s3] sm:$0x7]
  %v56 = vlaneseq
  %v57 = vshrl.u32 %v56, 7
  %v58 = vsub.s32 0, %v57
  %v59 = vrot.slane %v55, %v58
  %v62 = vunpack.c.l.b16 %v20
  %v63 = vunpack.c.l.b16 %v21
  %v64 = vpack.c.b16 %v63, %v62
  %vm66 = vcmask 130048
  %v68 = vsel %vm66, %v19, 0
  %70 = vmatprep.subr.bf16.mxu0 0
  %71 = vmatpush1.bf16.msra.mxu0 0
  %72 = vmatprep.subr.bf16.mxu0 0
  %73 = vmatpush1.bf16.msra.mxu0 0
  %74 = vmatprep.subr.bf16.mxu0 0
  %75 = vmatpush1.bf16.msra.mxu0 0
  %76 = vmatprep.subr.bf16.mxu0 0
  %77 = vmatpush1.bf16.msra.mxu0 0
  %78 = vmatprep.subr.bf16.mxu0 0
  %79 = vmatpush1.bf16.msra.mxu0 0
  %80 = vmatprep.subr.bf16.mxu0 0
  %81 = vmatpush1.bf16.msra.mxu0 0
  %82 = vmatprep.subr.bf16.mxu0 0
  %83 = vmatpush1.bf16.msra.mxu0 0
  %84 = vmatprep.subr.bf16.mxu0 0
  %85 = vmatpush1.bf16.msra.mxu0 %v64
  %86 = vmatprep.subr.bf16.mxu0 0
  %87 = vmatpush2.bf16.msra.mxu0 0
  %88 = vmatprep.subr.bf16.mxu0 0
  %89 = vmatpush2.bf16.msra.mxu0 0
  %90 = vmatprep.subr.bf16.mxu0 0
  %91 = vmatpush2.bf16.msra.mxu0 0
  %92 = vmatprep.subr.bf16.mxu0 0
  %93 = vmatpush2.bf16.msra.mxu0 0
  %94 = vmatprep.subr.bf16.mxu0 0
  %95 = vmatpush2.bf16.msra.mxu0 0
  %96 = vmatprep.subr.bf16.mxu0 0
  %97 = vmatpush2.bf16.msra.mxu0 0
  %98 = vmatprep.subr.bf16.mxu0 0
  %99 = vmatpush2.bf16.msra.mxu0 0
  %100 = vmatprep.subr.bf16.mxu0 0
  %101 = vmatpush2.bf16.msra.mxu0 0
  %102 = vmatprep.mubr.bf16.mxu0 0
  %103 = vmatmul.mubr.bf16.gmra.mxu0 %v68
  %v104 = vpop.f32.mrf.mxu0
  %v105 = vadd.f32 %v59, %v104
  %v106 = vpop.f32.mrf.mxu0
  %v107 = vpop.f32.mrf.mxu0
  %v108 = vpop.f32.mrf.mxu0
  %109 = vdwg.mxu0
  %v110 = vmax.f32 %v105, 0.0
  %v111 = vpack.c.bf16 %v110, %v110
  %v112 = vlaneseq
  %v113 = vshrl.u32 %v112, 7
  %v114 = vsub.s32 1, %v113
  %v115 = vrot.slane %v55, %v114
  %v132 = vunpack.c.l.b16 %v22
  %v133 = vunpack.c.l.b16 %v23
  %v134 = vunpack.c.l.b16 %v24
  %v135 = vunpack.c.l.b16 %v25
  %v136 = vunpack.c.l.b16 %v26
  %v137 = vunpack.c.l.b16 %v27
  %v138 = vunpack.c.l.b16 %v28
  %v139 = vunpack.c.l.b16 %v29
  %v140 = vunpack.c.l.b16 %v30
  %v141 = vunpack.c.l.b16 %v31
  %v142 = vunpack.c.l.b16 %v32
  %v143 = vunpack.c.l.b16 %v33
  %v144 = vunpack.c.l.b16 %v34
  %v145 = vunpack.c.l.b16 %v35
  %v146 = vunpack.c.l.b16 %v36
  %v147 = vunpack.c.l.b16 %v37
  %v148 = vpack.c.b16 %v133, %v132
  %v149 = vpack.c.b16 %v135, %v134
  %v150 = vpack.c.b16 %v137, %v136
  %v151 = vpack.c.b16 %v139, %v138
  %v152 = vpack.c.b16 %v141, %v140
  %v153 = vpack.c.b16 %v143, %v142
  %v154 = vpack.c.b16 %v145, %v144
  %v155 = vpack.c.b16 %v147, %v146
  %164 = vmatprep.subr.bf16.mxu0 0
  %165 = vmatpush1.bf16.msra.mxu0 %v155
  %166 = vmatprep.subr.bf16.mxu0 0
  %167 = vmatpush1.bf16.msra.mxu0 %v154
  %168 = vmatprep.subr.bf16.mxu0 0
  %169 = vmatpush1.bf16.msra.mxu0 %v153
  %170 = vmatprep.subr.bf16.mxu0 0
  %171 = vmatpush1.bf16.msra.mxu0 %v152
  %172 = vmatprep.subr.bf16.mxu0 0
  %173 = vmatpush1.bf16.msra.mxu0 %v151
  %174 = vmatprep.subr.bf16.mxu0 0
  %175 = vmatpush1.bf16.msra.mxu0 %v150
  %176 = vmatprep.subr.bf16.mxu0 0
  %177 = vmatpush1.bf16.msra.mxu0 %v149
  %178 = vmatprep.subr.bf16.mxu0 0
  %179 = vmatpush1.bf16.msra.mxu0 %v148
  %180 = vmatprep.subr.bf16.mxu0 0
  %181 = vmatpush2.bf16.msra.mxu0 0
  %182 = vmatprep.subr.bf16.mxu0 0
  %183 = vmatpush2.bf16.msra.mxu0 0
  %184 = vmatprep.subr.bf16.mxu0 0
  %185 = vmatpush2.bf16.msra.mxu0 0
  %186 = vmatprep.subr.bf16.mxu0 0
  %187 = vmatpush2.bf16.msra.mxu0 0
  %188 = vmatprep.subr.bf16.mxu0 0
  %189 = vmatpush2.bf16.msra.mxu0 0
  %190 = vmatprep.subr.bf16.mxu0 0
  %191 = vmatpush2.bf16.msra.mxu0 0
  %192 = vmatprep.subr.bf16.mxu0 0
  %193 = vmatpush2.bf16.msra.mxu0 0
  %194 = vmatprep.subr.bf16.mxu0 0
  %195 = vmatpush2.bf16.msra.mxu0 0
  %196 = vmatprep.mubr.bf16.mxu0 0
  %197 = vmatmul.mubr.bf16.gmra.mxu0 %v111
  %v198 = vpop.f32.mrf.mxu0
  %v199 = vadd.f32 %v115, %v198
  %v200 = vpop.f32.mrf.mxu0
  %v201 = vpop.f32.mrf.mxu0
  %v202 = vpop.f32.mrf.mxu0
  %203 = vdwg.mxu0
  %v204 = vmax.f32 %v199, 0.0
  %v205 = vpack.c.bf16 %v204, %v204
  %v206 = vlaneseq
  %v207 = vshrl.u32 %v206, 7
  %v208 = vsub.s32 2, %v207
  %v209 = vrot.slane %v55, %v208
  %v226 = vunpack.c.l.b16 %v39
  %v227 = vunpack.c.l.b16 %v40
  %v228 = vunpack.c.l.b16 %v41
  %v229 = vunpack.c.l.b16 %v42
  %v230 = vunpack.c.l.b16 %v43
  %v231 = vunpack.c.l.b16 %v44
  %v232 = vunpack.c.l.b16 %v45
  %v233 = vunpack.c.l.b16 %v46
  %v234 = vunpack.c.l.b16 %v47
  %v235 = vunpack.c.l.b16 %v48
  %v236 = vunpack.c.l.b16 %v49
  %v237 = vunpack.c.l.b16 %v50
  %v238 = vunpack.c.l.b16 %v51
  %v239 = vunpack.c.l.b16 %v52
  %v240 = vunpack.c.l.b16 %v53
  %v241 = vunpack.c.l.b16 %v54
  %v242 = vpack.c.b16 %v227, %v226
  %v243 = vpack.c.b16 %v229, %v228
  %v244 = vpack.c.b16 %v231, %v230
  %v245 = vpack.c.b16 %v233, %v232
  %v246 = vpack.c.b16 %v235, %v234
  %v247 = vpack.c.b16 %v237, %v236
  %v248 = vpack.c.b16 %v239, %v238
  %v249 = vpack.c.b16 %v241, %v240
  %258 = vmatprep.subr.bf16.mxu0 0
  %259 = vmatpush1.bf16.msra.mxu0 %v249
  %260 = vmatprep.subr.bf16.mxu0 0
  %261 = vmatpush1.bf16.msra.mxu0 %v248
  %262 = vmatprep.subr.bf16.mxu0 0
  %263 = vmatpush1.bf16.msra.mxu0 %v247
  %264 = vmatprep.subr.bf16.mxu0 0
  %265 = vmatpush1.bf16.msra.mxu0 %v246
  %266 = vmatprep.subr.bf16.mxu0 0
  %267 = vmatpush1.bf16.msra.mxu0 %v245
  %268 = vmatprep.subr.bf16.mxu0 0
  %269 = vmatpush1.bf16.msra.mxu0 %v244
  %270 = vmatprep.subr.bf16.mxu0 0
  %271 = vmatpush1.bf16.msra.mxu0 %v243
  %272 = vmatprep.subr.bf16.mxu0 0
  %273 = vmatpush1.bf16.msra.mxu0 %v242
  %274 = vmatprep.subr.bf16.mxu0 0
  %275 = vmatpush2.bf16.msra.mxu0 0
  %276 = vmatprep.subr.bf16.mxu0 0
  %277 = vmatpush2.bf16.msra.mxu0 0
  %278 = vmatprep.subr.bf16.mxu0 0
  %279 = vmatpush2.bf16.msra.mxu0 0
  %280 = vmatprep.subr.bf16.mxu0 0
  %281 = vmatpush2.bf16.msra.mxu0 0
  %282 = vmatprep.subr.bf16.mxu0 0
  %283 = vmatpush2.bf16.msra.mxu0 0
  %284 = vmatprep.subr.bf16.mxu0 0
  %285 = vmatpush2.bf16.msra.mxu0 0
  %286 = vmatprep.subr.bf16.mxu0 0
  %287 = vmatpush2.bf16.msra.mxu0 0
  %288 = vmatprep.subr.bf16.mxu0 0
  %289 = vmatpush2.bf16.msra.mxu0 0
  %290 = vmatprep.mubr.bf16.mxu0 0
  %291 = vmatmul.mubr.bf16.gmra.mxu0 %v205
  %v292 = vpop.f32.mrf.mxu0
  %v293 = vadd.f32 %v209, %v292
  %v294 = vpop.f32.mrf.mxu0
  %v295 = vpop.f32.mrf.mxu0
  %v296 = vpop.f32.mrf.mxu0
  %297 = vdwg.mxu0
  %298 = vst [vmem:[%s4] sm:$0xff] %v293
  // Predicated region
  $region18: #{_dqn_forward_impl.1} parent=0 // pred_check
    _
  $region19: #{_dqn_forward_impl.1} parent=0 // pred_check_branch
    %300 = sbr.rel (0) target = $region21
  $region20: #{_dqn_forward_impl.1} parent=0 // pred_region
    _
  $region21: #{_dqn_forward_impl.1} parent=0 // pred_fallthru
    _
  // Predicated region
  $region22: #{_dqn_forward_impl.1} parent=0 // pred_check
    _
  $region23: #{_dqn_forward_impl.1} parent=0 // pred_check_branch
    %302 = sbr.rel (0) target = $region25
  $region24: #{_dqn_forward_impl.1} parent=0 // pred_region
    _
  $region25: #{_dqn_forward_impl.1} parent=0 // pred_fallthru
    _

</llo_original>
